<compile_context>
chip_gen: v5e
topology: v5e:2x2
jax: 0.10.0
libtpu: 0.0.40
codegen_flags: <defaults>
</compile_context>

<pallas_src>
import jax
import jax.numpy as jnp
from jax.experimental import pallas as pl
from jax.experimental.pallas import tpu as pltpu


# Packed f32 row-parameter layout (rows tile, [6, max(F1, F2)]):
#   row 0: b1   (fc1 bias)          row 3: b2 (fc2 bias)
#   row 1: gamma1 (bn1 weight)      row 4: b3 (fc3 bias, col 0)
#   row 2: beta1  (bn1 bias)        row 5: w3^T (fc3 weight, kept f32)


def _critic_head(h1n, action_ref, w2_ref, rows_ref, out_ref):
    """Shared fc2(+relu) / fc3 tail.  h1n is the bn1 output, [TB, F1] f32."""
    F1 = h1n.shape[1]
    A = action_ref.shape[1]
    F2 = w2_ref.shape[1]

    # Each row below is consumed exactly once per tile, so the implicit
    # broadcast happens once (no repeated broadcast_in_dim to hoist).
    b2 = rows_ref[3:4, 0:F2]                       # [1, F2]
    b3 = rows_ref[4:5, 0:1]                        # [1, 1]
    w3r = rows_ref[5:6, 0:F2]                      # [1, F2] fc3 weight row (f32)

    if F1 % 128 == 0:
        # Fused fc2: F1 is a lane-tile boundary, so the concat is aligned and
        # cheap; one K=F1+A MXU pass on the 256-deep v6e/v7x MXU.
        xcat = jnp.concatenate([h1n, action_ref[...]], axis=1)      # [TB, F1+A]
        h2 = jnp.dot(xcat.astype(jnp.bfloat16), w2_ref[...],
                     preferred_element_type=jnp.float32)
    else:
        # TODO(synk): pad the packed w2 so the action rows start on a 16-row
        # sublane boundary for non-128-multiple fc1 sizes (avoids a repack).
        h2 = (jnp.dot(h1n.astype(jnp.bfloat16), w2_ref[0:F1, :],
                      preferred_element_type=jnp.float32)
              + jnp.dot(action_ref[...].astype(jnp.bfloat16), w2_ref[F1:F1 + A, :],
                        preferred_element_type=jnp.float32))
    h2 = jnp.maximum(h2 + b2, 0.0)                 # [TB, F2] f32

    # fc3 as a VPU multiply + XLU lane reduce (an N=1 MXU matmul would waste the
    # array and pop a nearly empty result tile); output stays [TB, 1].
    out_ref[...] = jnp.sum(h2 * w3r, axis=1, keepdims=True) + b3


def critic_kernel(state_ref, action_ref, w1_ref, w2_ref, rows_ref, out_ref):
    """Whole-batch kernel (tiny batches): fc1+relu, in-kernel bn1, fc2+relu, fc3."""
    B = state_ref.shape[0]
    F1 = w1_ref.shape[1]

    b1 = rows_ref[0:1, 0:F1]
    g1 = rows_ref[1:2, 0:F1]
    be1 = rows_ref[2:3, 0:F1]

    # fc1 + relu (bf16 MXU inputs, f32 accumulation).
    h1 = jnp.maximum(
        jnp.dot(state_ref[...].astype(jnp.bfloat16), w1_ref[...],
                preferred_element_type=jnp.float32) + b1, 0.0)       # [B, F1]

    # bn1, training-mode batch stats.  Single-pass: var = E[x^2] - mean^2
    # (one traversal of h1; cancellation is benign in f32 with relu inputs).
    inv_b = 1.0 / B
    s1 = jnp.sum(h1, axis=0, keepdims=True)
    s2 = jnp.sum(h1 * h1, axis=0, keepdims=True)
    mean = s1 * inv_b
    var = s2 * inv_b - mean * mean
    scale = jax.lax.rsqrt(var + 1e-5) * g1          # gamma folded into the scale row
    shift = be1 - mean * scale
    h1n = h1 * scale + shift                        # [B, F1]

    _critic_head(h1n, action_ref, w2_ref, rows_ref, out_ref)


def critic_stats_kernel(state_ref, w1_ref, rows_ref, part_ref):
    """Pass 1 (batch grid): per-tile partial BN statistics over relu(fc1)."""
    F1 = w1_ref.shape[1]
    b1 = rows_ref[0:1, 0:F1]
    h1 = jnp.maximum(
        jnp.dot(state_ref[...].astype(jnp.bfloat16), w1_ref[...],
                preferred_element_type=jnp.float32) + b1, 0.0)       # [TB, F1]
    part_ref[0] = jnp.concatenate(
        [jnp.sum(h1, axis=0, keepdims=True),
         jnp.sum(h1 * h1, axis=0, keepdims=True)], axis=0)           # [2, F1]


def critic_apply_kernel(state_ref, action_ref, w1_ref, w2_ref, rows_ref, bn_ref,
                        out_ref):
    """Pass 2 (batch grid): recompute fc1, apply precomputed BN scale/shift, head."""
    F1 = w1_ref.shape[1]
    b1 = rows_ref[0:1, 0:F1]
    h1 = jnp.maximum(
        jnp.dot(state_ref[...].astype(jnp.bfloat16), w1_ref[...],
                preferred_element_type=jnp.float32) + b1, 0.0)       # [TB, F1]
    h1n = h1 * bn_ref[0:1, :] + bn_ref[1:2, :]
    _critic_head(h1n, action_ref, w2_ref, rows_ref, out_ref)


def init_critic_params(key, state_size, action_size, fc1_size=128, fc2_size=128):
    """Mirrors Critic.__init__ + reset_params.

    hidden_init uses 1/sqrt(weight.size(0)) == 1/sqrt(out_features) for the
    reset weights; biases keep PyTorch Linear's default
    U(-1/sqrt(fan_in), 1/sqrt(fan_in)).  Weights are stored [in, out].
    """
    ks = jax.random.split(key, 6)
    fan2 = fc1_size + action_size
    lim1 = 1.0 / (fc1_size ** 0.5)     # hidden_init(fc1)
    lim2 = 1.0 / (fc2_size ** 0.5)     # hidden_init(fc2)
    lim3 = 0.003                       # fc3 reset range

    w1 = jax.random.uniform(ks[0], (state_size, fc1_size), jnp.float32, -lim1, lim1)
    w2 = jax.random.uniform(ks[1], (fan2, fc2_size), jnp.float32, -lim2, lim2)
    w3 = jax.random.uniform(ks[2], (fc2_size, 1), jnp.float32, -lim3, lim3)

    b1 = jax.random.uniform(ks[3], (fc1_size,), jnp.float32,
                            -1.0 / state_size ** 0.5, 1.0 / state_size ** 0.5)
    b2 = jax.random.uniform(ks[4], (fc2_size,), jnp.float32,
                            -1.0 / fan2 ** 0.5, 1.0 / fan2 ** 0.5)
    b3 = jax.random.uniform(ks[5], (), jnp.float32,
                            -1.0 / fc2_size ** 0.5, 1.0 / fc2_size ** 0.5)

    gamma1 = jnp.ones((fc1_size,), jnp.float32)   # BatchNorm1d(fc1_size) defaults
    beta1 = jnp.zeros((fc1_size,), jnp.float32)
    return dict(w1=w1, b1=b1, w2=w2, b2=b2, w3=w3, b3=b3,
                gamma1=gamma1, beta1=beta1)


def pack_critic_params(params):
    """One-time conversion to kernel operand layout: bf16 matmul weights (fc1,
    packed fc2) + a single packed [6, P] f32 row tile (b1, gamma1, beta1, b2,
    b3, w3^T).  fc3's weight stays f32 in the row tile (used as a VPU row)."""
    F1 = params["w1"].shape[1]
    F2 = params["w2"].shape[1]
    P = max(F1, F2)
    rows = jnp.zeros((6, P), jnp.float32)
    rows = rows.at[0, :F1].set(params["b1"])
    rows = rows.at[1, :F1].set(params["gamma1"])
    rows = rows.at[2, :F1].set(params["beta1"])
    rows = rows.at[3, :F2].set(params["b2"])
    rows = rows.at[4, 0].set(params["b3"])
    rows = rows.at[5, :F2].set(params["w3"][:, 0])
    return dict(
        w1=params["w1"].astype(jnp.bfloat16),
        w2=params["w2"].astype(jnp.bfloat16),   # packed [F1 + A, F2]
        rows=rows,
    )


def critic_forward(state, action, packed, *, batch_tile=None):
    """state: [B, state_size] f32; action: [B, action_size] f32 -> Q [B, 1] f32.

    batch_tile=None (or >= B): single grid-less call (tiny batches).
    batch_tile=TB: batch grid of B//TB tiles, "parallel" (v7x megacore), with
    VMEM-resident weights and a two-pass BatchNorm.  Use TB >= 512 in production.
    """
    B, S = state.shape
    A = action.shape[1]
    F1 = packed["w1"].shape[1]
    F2 = packed["w2"].shape[1]
    rows = packed["rows"]
    n_rows, P = rows.shape

    if batch_tile is None or batch_tile >= B:
        vmem = pl.BlockSpec(memory_space=pltpu.MemorySpace.VMEM)
        return pl.pallas_call(
            critic_kernel,
            out_shape=jax.ShapeDtypeStruct((B, 1), jnp.float32),
            in_specs=[vmem] * 5,
            out_specs=vmem,
        )(state, action, packed["w1"], packed["w2"], rows)

    TB = batch_tile
    assert TB % 8 == 0, "batch_tile must be a multiple of 8 (sublane tile)"
    assert B % TB == 0, "pad the replay batch to a multiple of batch_tile"
    T = B // TB
    parallel = pltpu.CompilerParams(dimension_semantics=("parallel",))

    # Pass 1: per-tile partial (sum, sum^2) of relu(fc1(state)).
    partial = pl.pallas_call(
        critic_stats_kernel,
        out_shape=jax.ShapeDtypeStruct((T, 2, F1), jnp.float32),
        grid=(T,),
        in_specs=[pl.BlockSpec((TB, S), lambda i: (i, 0)),
                  pl.BlockSpec((S, F1), lambda i: (0, 0)),       # VMEM-resident
                  pl.BlockSpec((n_rows, P), lambda i: (0, 0))],  # VMEM-resident
        out_specs=pl.BlockSpec((1, 2, F1), lambda i: (i, 0, 0)),
        compiler_params=parallel,
    )(state, packed["w1"], rows)

    # Tiny cross-tile fold: global batch stats -> one scale/shift row pair
    # (gamma/beta folded in), so batch tiles in pass 2 are fully independent.
    s = jnp.sum(partial, axis=0)                   # [2, F1]
    mean = s[0] / B
    var = s[1] / B - mean * mean
    scale = jax.lax.rsqrt(var + 1e-5) * rows[1, :F1]
    shift = rows[2, :F1] - mean * scale
    bn_rows = jnp.stack([scale, shift], axis=0)    # [2, F1]

    # Pass 2: recompute fc1 (K=state_size; cheaper than storing h1 to HBM),
    # apply BN, fused fc2, fc3.  Weights/rows stay VMEM-resident across tiles;
    # only state/action/out tiles move per grid step.
    return pl.pallas_call(
        critic_apply_kernel,
        out_shape=jax.ShapeDtypeStruct((B, 1), jnp.float32),
        grid=(T,),
        in_specs=[pl.BlockSpec((TB, S), lambda i: (i, 0)),
                  pl.BlockSpec((TB, A), lambda i: (i, 0)),
                  pl.BlockSpec((S, F1), lambda i: (0, 0)),
                  pl.BlockSpec((F1 + A, F2), lambda i: (0, 0)),
                  pl.BlockSpec((n_rows, P), lambda i: (0, 0)),
                  pl.BlockSpec((2, F1), lambda i: (0, 0))],
        out_specs=pl.BlockSpec((TB, 1), lambda i: (i, 0)),
        compiler_params=parallel,
    )(state, action, packed["w1"], packed["w2"], rows, bn_rows)


def critic_forward_ref(state, action, params):
    """Pure-JAX reference of the PyTorch forward, mirroring the kernel's
    precision choices (bf16 MXU inputs with f32 accumulation for fc1/fc2,
    f32 fc3)."""
    def bdot(a, b):
        return jnp.dot(a.astype(jnp.bfloat16), b.astype(jnp.bfloat16),
                       preferred_element_type=jnp.float32)

    h1 = jnp.maximum(bdot(state, params["w1"]) + params["b1"][None, :], 0.0)
    mean = jnp.mean(h1, axis=0, keepdims=True)
    var = jnp.mean((h1 - mean) ** 2, axis=0, keepdims=True)
    h1n = ((h1 - mean) * jax.lax.rsqrt(var + 1e-5) * params["gamma1"][None, :]
           + params["beta1"][None, :])
    x = jnp.concatenate([h1n, action], axis=1)
    h2 = jnp.maximum(bdot(x, params["w2"]) + params["b2"][None, :], 0.0)
    return jnp.dot(h2, params["w3"]) + params["b3"]


if __name__ == "__main__":
    STATE_SIZE = 16
    ACTION_SIZE = 4

    key = jax.random.PRNGKey(0)
    k_params, k_s0, k_a0, k_s1, k_a1 = jax.random.split(key, 5)
    params = init_critic_params(k_params, STATE_SIZE, ACTION_SIZE)
    packed = pack_critic_params(params)

    forward = jax.jit(critic_forward, static_argnames=("batch_tile",))

    # Tiny batch: single grid-less call.
    B_small = 8
    state = jax.random.normal(k_s0, (B_small, STATE_SIZE), jnp.float32)
    action = jax.random.uniform(k_a0, (B_small, ACTION_SIZE), jnp.float32, -1.0, 1.0)
    q = jax.block_until_ready(forward(state, action, packed))
    q_ref = critic_forward_ref(state, action, params)
    assert q.shape == (B_small, 1)
    assert jnp.allclose(q, q_ref, atol=2e-3, rtol=2e-3)

    # Replay-style batch: tiled, "parallel" batch grid (2 tiles here to keep the
    # demo small; production uses batch_tile >= 512 to amortize per-step cost).
    B_big = 256
    state_b = jax.random.normal(k_s1, (B_big, STATE_SIZE), jnp.float32)
    action_b = jax.random.uniform(k_a1, (B_big, ACTION_SIZE), jnp.float32, -1.0, 1.0)
    q_b = jax.block_until_ready(forward(state_b, action_b, packed, batch_tile=128))
    q_b_ref = critic_forward_ref(state_b, action_b, params)
    assert q_b.shape == (B_big, 1)
    assert jnp.allclose(q_b, q_b_ref, atol=2e-3, rtol=2e-3)

    print("KERNEL_OK")
</pallas_src>

<mosaic_0001>
module attributes {stable_mosaic.version = 11 : i64} {
  func.func @critic_kernel(%arg0: memref<8x16xf32, #tpu.memory_space<vmem>>, %arg1: memref<8x4xf32, #tpu.memory_space<vmem>>, %arg2: memref<16x128xbf16, #tpu.memory_space<vmem>>, %arg3: memref<132x128xbf16, #tpu.memory_space<vmem>>, %arg4: memref<6x128xf32, #tpu.memory_space<vmem>>, %arg5: memref<8x1xf32, #tpu.memory_space<vmem>>) attributes {dimension_semantics = [], scalar_prefetch = 0 : i64, scratch_operands = 0 : i64, tpu.core_type = #tpu.core_type<tc>} {
    %c0 = arith.constant 0 : index
    %c0_0 = arith.constant 0 : index
    %0 = vector.load %arg4[%c0, %c0_0] : memref<6x128xf32, #tpu.memory_space<vmem>>, vector<1x128xf32>
    %c1 = arith.constant 1 : index
    %c0_1 = arith.constant 0 : index
    %1 = vector.load %arg4[%c1, %c0_1] : memref<6x128xf32, #tpu.memory_space<vmem>>, vector<1x128xf32>
    %c2 = arith.constant 2 : index
    %c0_2 = arith.constant 0 : index
    %2 = vector.load %arg4[%c2, %c0_2] : memref<6x128xf32, #tpu.memory_space<vmem>>, vector<1x128xf32>
    %c0_3 = arith.constant 0 : index
    %c0_4 = arith.constant 0 : index
    %3 = vector.load %arg0[%c0_3, %c0_4] : memref<8x16xf32, #tpu.memory_space<vmem>>, vector<8x16xf32>
    %4 = arith.truncf %3 : vector<8x16xf32> to vector<8x16xbf16>
    %c0_5 = arith.constant 0 : index
    %c0_6 = arith.constant 0 : index
    %5 = vector.load %arg2[%c0_5, %c0_6] : memref<16x128xbf16, #tpu.memory_space<vmem>>, vector<16x128xbf16>
    %cst = arith.constant dense<0.000000e+00> : vector<8x128xf32>
    %6 = tpu.matmul %4, %5, %cst {dimension_numbers = #tpu.dot_dimension_numbers<[1], [0], [0], [1], [0, 0, 1, 1], [], []>} : vector<8x16xbf16>, vector<16x128xbf16>, vector<8x128xf32> -> vector<8x128xf32>
    %7 = vector.broadcast %0 : vector<1x128xf32> to vector<8x128xf32>
    %8 = arith.addf %6, %7 : vector<8x128xf32>
    %cst_7 = arith.constant 0.000000e+00 : f32
    %9 = vector.broadcast %cst_7 : f32 to vector<8x128xf32>
    %10 = arith.maximumf %8, %9 : vector<8x128xf32>
    %cst_8 = arith.constant dense<0.000000e+00> : vector<128xf32>
    %11 = vector.multi_reduction <add>, %10, %cst_8 [0] : vector<8x128xf32> to vector<128xf32>
    %12 = vector.shape_cast %11 : vector<128xf32> to vector<1x128xf32>
    %13 = arith.mulf %10, %10 : vector<8x128xf32>
    %cst_9 = arith.constant dense<0.000000e+00> : vector<128xf32>
    %14 = vector.multi_reduction <add>, %13, %cst_9 [0] : vector<8x128xf32> to vector<128xf32>
    %15 = vector.shape_cast %14 : vector<128xf32> to vector<1x128xf32>
    %cst_10 = arith.constant 1.250000e-01 : f32
    %16 = vector.broadcast %cst_10 : f32 to vector<1x128xf32>
    %17 = arith.mulf %12, %16 : vector<1x128xf32>
    %cst_11 = arith.constant 1.250000e-01 : f32
    %18 = vector.broadcast %cst_11 : f32 to vector<1x128xf32>
    %19 = arith.mulf %15, %18 : vector<1x128xf32>
    %20 = arith.mulf %17, %17 : vector<1x128xf32>
    %21 = arith.subf %19, %20 : vector<1x128xf32>
    %cst_12 = arith.constant 9.99999974E-6 : f32
    %22 = vector.broadcast %cst_12 : f32 to vector<1x128xf32>
    %23 = arith.addf %21, %22 : vector<1x128xf32>
    %24 = math.rsqrt %23 : vector<1x128xf32>
    %25 = arith.mulf %24, %1 : vector<1x128xf32>
    %26 = arith.mulf %17, %25 : vector<1x128xf32>
    %27 = arith.subf %2, %26 : vector<1x128xf32>
    %28 = vector.broadcast %25 : vector<1x128xf32> to vector<8x128xf32>
    %29 = arith.mulf %10, %28 : vector<8x128xf32>
    %30 = vector.broadcast %27 : vector<1x128xf32> to vector<8x128xf32>
    %31 = arith.addf %29, %30 : vector<8x128xf32>
    %c3 = arith.constant 3 : index
    %c0_13 = arith.constant 0 : index
    %32 = vector.load %arg4[%c3, %c0_13] : memref<6x128xf32, #tpu.memory_space<vmem>>, vector<1x128xf32>
    %c4 = arith.constant 4 : index
    %c0_14 = arith.constant 0 : index
    %33 = vector.load %arg4[%c4, %c0_14] : memref<6x128xf32, #tpu.memory_space<vmem>>, vector<1x1xf32>
    %c5 = arith.constant 5 : index
    %c0_15 = arith.constant 0 : index
    %34 = vector.load %arg4[%c5, %c0_15] : memref<6x128xf32, #tpu.memory_space<vmem>>, vector<1x128xf32>
    %c0_16 = arith.constant 0 : index
    %c0_17 = arith.constant 0 : index
    %35 = vector.load %arg1[%c0_16, %c0_17] : memref<8x4xf32, #tpu.memory_space<vmem>>, vector<8x4xf32>
    %36 = tpu.concatenate %31, %35 in 1 : vector<8x128xf32>, vector<8x4xf32> -> vector<8x132xf32>
    %37 = arith.truncf %36 : vector<8x132xf32> to vector<8x132xbf16>
    %c0_18 = arith.constant 0 : index
    %c0_19 = arith.constant 0 : index
    %38 = vector.load %arg3[%c0_18, %c0_19] : memref<132x128xbf16, #tpu.memory_space<vmem>>, vector<132x128xbf16>
    %cst_20 = arith.constant dense<0.000000e+00> : vector<8x128xf32>
    %39 = tpu.matmul %37, %38, %cst_20 {dimension_numbers = #tpu.dot_dimension_numbers<[1], [0], [0], [1], [0, 0, 1, 1], [], []>} : vector<8x132xbf16>, vector<132x128xbf16>, vector<8x128xf32> -> vector<8x128xf32>
    %40 = vector.broadcast %32 : vector<1x128xf32> to vector<8x128xf32>
    %41 = arith.addf %39, %40 : vector<8x128xf32>
    %cst_21 = arith.constant 0.000000e+00 : f32
    %42 = vector.broadcast %cst_21 : f32 to vector<8x128xf32>
    %43 = arith.maximumf %41, %42 : vector<8x128xf32>
    %44 = vector.broadcast %34 : vector<1x128xf32> to vector<8x128xf32>
    %45 = arith.mulf %43, %44 : vector<8x128xf32>
    %cst_22 = arith.constant dense<0.000000e+00> : vector<8xf32>
    %46 = vector.multi_reduction <add>, %45, %cst_22 [1] : vector<8x128xf32> to vector<8xf32>
    %47 = vector.shape_cast %46 : vector<8xf32> to vector<8x1xf32>
    %48 = vector.broadcast %33 : vector<1x1xf32> to vector<8x1xf32>
    %49 = arith.addf %47, %48 : vector<8x1xf32>
    %c0_23 = arith.constant 0 : index
    %c0_24 = arith.constant 0 : index
    %50 = vector.load %arg5[%c0_23, %c0_24] : memref<8x1xf32, #tpu.memory_space<vmem>>, vector<8x1xf32>
    tpu.vector_store %arg5[%c0_23, %c0_24], %49 {strides = array<i32>} : memref<8x1xf32, #tpu.memory_space<vmem>>, vector<8x1xf32>,
    return
  }
}

</mosaic_0001>

<llo_original>
// kernel: critic_forward.1
$region0: #{critic_forward.1}
  #allocation0 [shape = 'u32[]', space=smem, size = 0x4, offset = 0x4, fixed_abs, tag = 'smem constant byte address 0x4 - core index']
  #allocation1 [shape = 'u32[72,128]{1,0:T(1,128)}', space=vmem, size = 0x9000, scoped, tag = 'internal scratch']
  %s0 = inlined_call_operand.vmem [shape: f32[8,16], index: 0, kind: input, shape index: {}]
  %s1 = inlined_call_operand.vmem [shape: f32[8,4], index: 1, kind: input, shape index: {}]
  %s2 = inlined_call_operand.hbm [shape: bf16[16,128], index: 2, kind: input, shape index: {}]
  %s3 = inlined_call_operand.hbm [shape: bf16[132,128], index: 3, kind: input, shape index: {}]
  %s4 = inlined_call_operand.hbm [shape: f32[6,128], index: 4, kind: input, shape index: {}]
  %s5 = inlined_call_operand.vmem [shape: f32[8,1], index: 5, kind: output, shape index: {}]
  %s6 = sld [smem:[#allocation0]]
  $region42: #{critic_forward.1} parent=0
    _
  %s8 = ssub.s32 1, %s6
  %s9 = scalar_select 0, %s8, %s6
  $region1: #{critic_forward.1} parent=0
    #allocation2 [shape = 'u8[4096]{0}', space=vmem, size = 0x1000, scoped, tag = 'input window, operand 2, single buffered']
    #allocation3 [shape = 's32[1]{0}', space=sflag, size = 0x4, scoped, tag = 'scoped memory for critic_forward.1']
    #allocation4 [shape = 'u8[34816]{0}', space=vmem, size = 0x8800, scoped, tag = 'input window, operand 3, single buffered']
    #allocation5 [shape = 's32[1]{0}', space=sflag, size = 0x4, scoped, tag = 'scoped memory for critic_forward.1']
    #allocation6 [shape = 'u8[4096]{0}', space=vmem, size = 0x1000, scoped, tag = 'input window, operand 4, single buffered']
    %10 = vsyncpa [#allocation3], 0
    %11 = vsyncpa [#allocation5], 0
    // Predicated region
    $region2: #{critic_forward.1} parent=1 // pred_check
      _
    $region3: #{critic_forward.1} parent=1 // pred_check_branch
      %13 = sbr.rel (0) target = $region5
    $region4: #{critic_forward.1} parent=1 // pred_region
      _
    $region5: #{critic_forward.1} parent=1 // pred_fallthru
      _
    // Predicated region
    $region6: #{critic_forward.1} parent=1 // pred_check
      _
    $region7: #{critic_forward.1} parent=1 // pred_check_branch
      %15 = sbr.rel (0) target = $region9
    $region8: #{critic_forward.1} parent=1 // pred_region
      _
    $region9: #{critic_forward.1} parent=1 // pred_fallthru
      _
    // Predicated region
    $region10: #{critic_forward.1} parent=1 // pred_check
      _
    $region11: #{critic_forward.1} parent=1 // pred_check_branch
      %17 = sbr.rel (0) target = $region13
    $region12: #{critic_forward.1} parent=1 // pred_region
      %19 = vsyncadd [#allocation3], 0
      %s20 = sshll.u32 %s2, 4
      %s21 = int_to_ptr.hbm [resolvable:$true] %s20
      %s22 = sshll.u32 [#allocation2], 4
      %s23 = int_to_ptr.vmem [resolvable:$true] %s22
      %28 = dma.hbm_to_vmem [thread:$0]  %s21, 128, %s23, [#allocation3], 64, 64, 4
    $region13: #{critic_forward.1} parent=1 // pred_fallthru
      _
    // Predicated region
    $region14: #{critic_forward.1} parent=1 // pred_check
      _
    $region15: #{critic_forward.1} parent=1 // pred_check_branch
      %30 = sbr.rel (0) target = $region17
    $region16: #{critic_forward.1} parent=1 // pred_region
      %32 = vsyncadd [#allocation5], 0
      %s33 = sshll.u32 %s3, 4
      %s34 = int_to_ptr.hbm [resolvable:$true] %s33
      %s35 = sshll.u32 [#allocation4], 4
      %s36 = int_to_ptr.vmem [resolvable:$true] %s35
      %41 = dma.hbm_to_vmem [thread:$0]  %s34, 1088, %s36, [#allocation5], 64, 64, 4
    $region17: #{critic_forward.1} parent=1 // pred_fallthru
      _
    // Predicated region
    $region18: #{critic_forward.1} parent=1 // pred_check
      _
    $region19: #{critic_forward.1} parent=1 // pred_check_branch
      %43 = sbr.rel (0) target = $region21
    $region20: #{critic_forward.1} parent=1 // pred_region
      %45 = vsyncadd [#allocation5], 0
      %s47 = sshll.u32 %s4, 4
      %s48 = int_to_ptr.hbm [resolvable:$true] %s47
      %s49 = sshll.u32 [#allocation6], 4
      %s50 = int_to_ptr.vmem [resolvable:$true] %s49
      %52 = dma.hbm_to_vmem [thread:$0]  %s48, 128, %s50, [#allocation5]
    $region21: #{critic_forward.1} parent=1 // pred_fallthru
      _
    // Predicated region
    $region22: #{critic_forward.1} parent=1 // pred_check
      _
    $region23: #{critic_forward.1} parent=1 // pred_check_branch
      %54 = sbr.rel (0) target = $region25
    $region24: #{critic_forward.1} parent=1 // pred_region
      %56 = dma.done [#allocation3], 128
    $region25: #{critic_forward.1} parent=1 // pred_fallthru
      _
    // Predicated region
    $region26: #{critic_forward.1} parent=1 // pred_check
      _
    $region27: #{critic_forward.1} parent=1 // pred_check_branch
      %58 = sbr.rel (0) target = $region29
    $region28: #{critic_forward.1} parent=1 // pred_region
      %60 = dma.done [#allocation5], 1088
    $region29: #{critic_forward.1} parent=1 // pred_fallthru
      _
    // Predicated region
    $region30: #{critic_forward.1} parent=1 // pred_check
      _
    $region31: #{critic_forward.1} parent=1 // pred_check_branch
      %62 = sbr.rel (0) target = $region33
    $region32: #{critic_forward.1} parent=1 // pred_region
      %64 = dma.done [#allocation5], 128
    $region33: #{critic_forward.1} parent=1 // pred_fallthru
      _
    %v66 = vld [vmem:[#allocation6] sm:$0x1]
    %v67 = vld [vmem:[#allocation6 + $0x1] sm:$0x1]
    %v68 = vld [vmem:[#allocation6 + $0x2] sm:$0x1]
    %v69 = vld [vmem:[%s0] sm:$0xff]
    %v70 = vpack.c.bf16 %v69, %v69
    %v71 = vld [vmem:[#allocation2] sm:$0xf]
    %v72 = vld [vmem:[#allocation2 + $0x4] sm:$0xf]
    %v73 = vperm.slane %v66, 0
    %v76 = vunpack.c.l.b16 %v71
    %v77 = vunpack.c.l.b16 %v72
    %v78 = vpack.c.b16 %v77, %v76
    %vm80 = vcmask 130048
    %v82 = vsel %vm80, %v70, 0
    %84 = vmatpush.bf16.msra.mxu0 0
    %85 = vmatpush.bf16.msra.mxu0 0
    %86 = vmatpush.bf16.msra.mxu0 0
    %87 = vmatpush.bf16.msra.mxu0 0
    %88 = vmatpush.bf16.msra.mxu0 0
    %89 = vmatpush.bf16.msra.mxu0 0
    %90 = vmatpush.bf16.msra.mxu0 0
    %91 = vmatpush.bf16.msra.mxu0 %v78
    %92 = vmatmul.bf16.gmra.mxu0 %v82
    %v93 = vpop.f32.mrf.mxu0
    %v94 = vadd.f32 %v73, %v93
    %v95 = vpop.f32.mrf.mxu0
    %96 = vdwg.mxu0
    %v97 = vmax.f32 %v94, 0.0
    %v98 = vrot.slane %v97, 4
    %v99 = vadd.f32 %v97, %v98
    %v100 = vrot.slane %v99, 2
    %v101 = vadd.f32 %v99, %v100
    %v102 = vrot.slane %v101, 1
    %v103 = vadd.f32 %v101, %v102
    %v104 = vmul.f32 %v97, %v97
    %v105 = vrot.slane %v104, 4
    %v106 = vadd.f32 %v104, %v105
    %v107 = vrot.slane %v106, 2
    %v108 = vadd.f32 %v106, %v107
    %v109 = vrot.slane %v108, 1
    %v110 = vadd.f32 %v108, %v109
    %v111 = vmul.f32 %v103, 0.125
    %v112 = vmul.f32 %v110, 0.125
    %v113 = vmul.f32 %v111, %v111
    %v114 = vsub.f32 %v112, %v113
    %v115 = vadd.f32 %v114, 1e-05
    %v116 = vrsqrt.pop %v115
    %v117 = vmul.f32 %v116, %v115
    %v118 = vmul.f32 %v117, %v116
    %v119 = vmul.f32 0.5, %v118
    %v120 = vsub.f32 1.5, %v119
    %v121 = vmul.f32 %v116, %v120
    %vm122 = vweird.f32 %v115
    %vm123 = vweird.f32 %v116
    %vm124 = vmor %vm122, %vm123
    %v125 = vsel %vm124, %v116, %v121
    %v126 = vmul.f32 %v125, %v67
    %v127 = vmul.f32 %v111, %v126
    %v128 = vsub.f32 %v68, %v127
    %v129 = vperm.slane %v126, 0
    %v130 = vmul.f32 %v97, %v129
    %v131 = vperm.slane %v128, 0
    %v132 = vadd.f32 %v130, %v131
    %v133 = vld [vmem:[#allocation6 + $0x3] sm:$0x1]
    %v134 = vld [vmem:[#allocation6 + $0x4] sm:$0x1]
    %v135 = vld [vmem:[#allocation6 + $0x5] sm:$0x1]
    %v136 = vld [vmem:[%s1] sm:$0xff]
    %v137 = vpack.c.bf16 %v132, %v132
    %v138 = vpack.c.bf16 %v136, %v136
    %v139 = vld [vmem:[#allocation4] sm:$0xf]
    %v140 = vld [vmem:[#allocation4 + $0x4] sm:$0xf]
    %v141 = vld [vmem:[#allocation4 + $0x8] sm:$0xf]
    %v142 = vld [vmem:[#allocation4 + $0xc] sm:$0xf]
    %v143 = vld [vmem:[#allocation4 + $0x10] sm:$0xf]
    %v144 = vld [vmem:[#allocation4 + $0x14] sm:$0xf]
    %v145 = vld [vmem:[#allocation4 + $0x18] sm:$0xf]
    %v146 = vld [vmem:[#allocation4 + $0x1c] sm:$0xf]
    %v147 = vld [vmem:[#allocation4 + $0x20] sm:$0xf]
    %v148 = vld [vmem:[#allocation4 + $0x24] sm:$0xf]
    %v149 = vld [vmem:[#allocation4 + $0x28] sm:$0xf]
    %v150 = vld [vmem:[#allocation4 + $0x2c] sm:$0xf]
    %v151 = vld [vmem:[#allocation4 + $0x30] sm:$0xf]
    %v152 = vld [vmem:[#allocation4 + $0x34] sm:$0xf]
    %v153 = vld [vmem:[#allocation4 + $0x38] sm:$0xf]
    %v154 = vld [vmem:[#allocation4 + $0x3c] sm:$0xf]
    %v155 = vld [vmem:[#allocation4 + $0x40] sm:$0x3]
    %v156 = vperm.slane %v133, 0
    %v174 = vunpack.c.l.b16 %v139
    %v175 = vunpack.c.l.b16 %v140
    %v176 = vunpack.c.l.b16 %v141
    %v177 = vunpack.c.l.b16 %v142
    %v178 = vunpack.c.l.b16 %v143
    %v179 = vunpack.c.l.b16 %v144
    %v180 = vunpack.c.l.b16 %v145
    %v181 = vunpack.c.l.b16 %v146
    %v182 = vunpack.c.l.b16 %v147
    %v183 = vunpack.c.l.b16 %v148
    %v184 = vunpack.c.l.b16 %v149
    %v185 = vunpack.c.l.b16 %v150
    %v186 = vunpack.c.l.b16 %v151
    %v187 = vunpack.c.l.b16 %v152
    %v188 = vunpack.c.l.b16 %v153
    %v189 = vunpack.c.l.b16 %v154
    %v190 = vunpack.c.l.b16 %v155
    %v191 = vpack.c.b16 %v175, %v174
    %v192 = vpack.c.b16 %v177, %v176
    %v193 = vpack.c.b16 %v179, %v178
    %v194 = vpack.c.b16 %v181, %v180
    %v195 = vpack.c.b16 %v183, %v182
    %v196 = vpack.c.b16 %v185, %v184
    %v197 = vpack.c.b16 %v187, %v186
    %v198 = vpack.c.b16 %v189, %v188
    %v199 = vpack.c.b16 %v190, %v190
    %vm208 = vcmask 31744
    %v210 = vsel %vm208, %v138, 0
    %vm212 = vcmask 1041408
    %v214 = vsel %vm212, %v199, 0
    %216 = vmatpush.bf16.msra.mxu0 %v198
    %217 = vmatpush.bf16.msra.mxu0 %v197
    %218 = vmatpush.bf16.msra.mxu0 %v196
    %219 = vmatpush.bf16.msra.mxu0 %v195
    %220 = vmatpush.bf16.msra.mxu0 %v194
    %221 = vmatpush.bf16.msra.mxu0 %v193
    %222 = vmatpush.bf16.msra.mxu0 %v192
    %223 = vmatpush.bf16.msra.mxu0 %v191
    %224 = vmatmul.bf16.gmra.mxu0 %v137
    %v225 = vpop.f32.mrf.mxu0
    %v226 = vadd.f32 %v156, %v225
    %v227 = vpop.f32.mrf.mxu0
    %228 = vdwg.mxu0
    %229 = vmatpush.bf16.msra.mxu0 0
    %230 = vmatpush.bf16.msra.mxu0 0
    %231 = vmatpush.bf16.msra.mxu0 0
    %232 = vmatpush.bf16.msra.mxu0 0
    %233 = vmatpush.bf16.msra.mxu0 0
    %234 = vmatpush.bf16.msra.mxu0 0
    %235 = vmatpush.bf16.msra.mxu0 0
    %236 = vmatpush.bf16.msra.mxu0 %v214
    %237 = vmatmul.bf16.gmra.mxu0 %v210
    %v238 = vpop.f32.mrf.mxu0
    %v239 = vadd.f32 %v226, %v238
    %v240 = vpop.f32.mrf.mxu0
    %241 = vdwg.mxu0
    %v242 = vmax.f32 %v239, 0.0
    %v243 = vperm.slane %v135, 0
    %v244 = vmul.f32 %v242, %v243
    %245 = vadd.xlane.f32.xlu0 %v244
    %v246 = vpop.xlane.xlu0 %245
    %v247 = vperm.slane %v134, 0
    %v248 = vadd.f32 %v246, %v247
    %vm249 = vcmask 7168
    %250 = vst.msk [vmem:[%s5] sm:$0xff] %vm249, %v248
    // Predicated region
    $region34: #{critic_forward.1} parent=1 // pred_check
      _
    $region35: #{critic_forward.1} parent=1 // pred_check_branch
      %252 = sbr.rel (0) target = $region37
    $region36: #{critic_forward.1} parent=1 // pred_region
      _
    $region37: #{critic_forward.1} parent=1 // pred_fallthru
      _
    // Predicated region
    $region38: #{critic_forward.1} parent=1 // pred_check
      _
    $region39: #{critic_forward.1} parent=1 // pred_check_branch
      %254 = sbr.rel (0) target = $region41
    $region40: #{critic_forward.1} parent=1 // pred_region
      _
    $region41: #{critic_forward.1} parent=1 // pred_fallthru
      _
    %255 = vsyncpa [#allocation3], 1
    %256 = vsyncpa [#allocation5], 1

</llo_original>
